<compile_context>
chip_gen: v6e
topology: v6e:2x2x1
jax: 0.10.0
libtpu: 0.0.40
codegen_flags: <defaults>
</compile_context>

<pallas_src>
import functools
from typing import NamedTuple

import jax
import jax.numpy as jnp
from jax.experimental import pallas as pl
from jax.experimental.pallas import tpu as pltpu

LANE = 128
SUBLANE = 8


def _round_up(x, m):
    return ((x + m - 1) // m) * m


class CriticMeta(NamedTuple):
    state_dim: int
    action_dim: int
    sd_p: int   # padded state_dim (multiple of 8)
    l1: int     # padded fused hidden-1 width (multiple of 128)
    l2: int     # padded fused hidden-2 width (multiple of 128)
    l3: int     # padded fused output width  (multiple of 128)
    r_w1: int   # row offsets of each block inside the packed slab
    r_b1: int
    r_w2: int
    r_b2: int
    r_w3: int
    r_b3: int


def pack_critic_params(params1, params2):
    """Fuse the two QNets (block-diagonal) and pack everything into one slab.

    params = (W1, b1, W2, b2, W3, b3); W stored as [in, out], b as [1, out].
    Returns (slab f32[rows, lane_w], CriticMeta).  Call once, off the hot path.
    """
    w1a, b1a, w2a, b2a, w3a, b3a = params1
    w1b, b1b, w2b, b2b, w3b, b3b = params2

    sd, h0 = w1a.shape
    h1 = w2a.shape[1]
    ad = w3a.shape[1]

    # Fused (block-diagonal) weights: one MLP computing both nets at once.
    w1f = jnp.concatenate([w1a, w1b], axis=1)                       # [sd, 2*h0]
    b1f = jnp.concatenate([b1a, b1b], axis=1)                       # [1, 2*h0]
    z2 = jnp.zeros((h0, h1), jnp.float32)
    w2f = jnp.block([[w2a, z2], [z2, w2b]])                         # [2*h0, 2*h1]
    b2f = jnp.concatenate([b2a, b2b], axis=1)                       # [1, 2*h1]
    z3 = jnp.zeros((h1, ad), jnp.float32)
    w3f = jnp.block([[w3a, z3], [z3, w3b]])                         # [2*h1, 2*ad]
    b3f = jnp.concatenate([b3a, b3b], axis=1)                       # [1, 2*ad]

    sd_p = _round_up(sd, SUBLANE)
    l1 = _round_up(2 * h0, LANE)
    l2 = _round_up(2 * h1, LANE)
    l3 = _round_up(2 * ad, LANE)
    lane_w = max(l1, l2, l3)

    # Row offsets: every block starts on an 8-row (sublane) boundary.
    r_w1 = 0
    r_b1 = r_w1 + sd_p
    r_w2 = r_b1 + SUBLANE
    r_b2 = r_w2 + l1
    r_w3 = r_b2 + SUBLANE
    r_b3 = r_w3 + l2
    rows = r_b3 + SUBLANE

    slab = jnp.zeros((rows, lane_w), jnp.float32)
    slab = slab.at[r_w1:r_w1 + sd, :2 * h0].set(w1f)
    slab = slab.at[r_b1:r_b1 + 1, :2 * h0].set(b1f)
    slab = slab.at[r_w2:r_w2 + 2 * h0, :2 * h1].set(w2f)
    slab = slab.at[r_b2:r_b2 + 1, :2 * h1].set(b2f)
    slab = slab.at[r_w3:r_w3 + 2 * h1, :2 * ad].set(w3f)
    slab = slab.at[r_b3:r_b3 + 1, :2 * ad].set(b3f)

    meta = CriticMeta(state_dim=sd, action_dim=ad, sd_p=sd_p,
                      l1=l1, l2=l2, l3=l3,
                      r_w1=r_w1, r_b1=r_b1, r_w2=r_w2,
                      r_b2=r_b2, r_w3=r_w3, r_b3=r_b3)
    return slab, meta


def _critic_fused_kernel(s_ref, p_ref, q_ref, *,
                         sd_p, l1, l2, l3,
                         r_w1, r_b1, r_w2, r_b2, r_w3, r_b3):
    """Both QNets as one 3-layer MLP; weights read from the packed slab."""
    s = s_ref[...]                                   # [TILE_B, sd_p]

    w1 = p_ref[r_w1:r_w1 + sd_p, 0:l1]
    b1 = p_ref[r_b1:r_b1 + 1, 0:l1]
    w2 = p_ref[r_w2:r_w2 + l1, 0:l2]
    b2 = p_ref[r_b2:r_b2 + 1, 0:l2]
    w3 = p_ref[r_w3:r_w3 + l2, 0:l3]
    b3 = p_ref[r_b3:r_b3 + 1, 0:l3]

    h = jnp.dot(s, w1, preferred_element_type=jnp.float32) + b1
    h = jnp.maximum(h, 0.0)
    h = jnp.dot(h, w2, preferred_element_type=jnp.float32) + b2
    h = jnp.maximum(h, 0.0)
    q = jnp.dot(h, w3, preferred_element_type=jnp.float32) + b3
    q_ref[...] = q.astype(q_ref.dtype)               # [TILE_B, l3] lane-dense


@functools.partial(jax.jit, static_argnames=("meta",))
def critic_forward(s, slab, *, meta: CriticMeta):
    """Critic.forward: s [batch, state_dim] -> (q1, q2), each [batch, action_dim]."""
    batch = s.shape[0]
    sd, ad = meta.state_dim, meta.action_dim

    # Pad batch (sublane tile) and pick a batch tile; pad features to sd_p.
    tile_b = min(512, _round_up(batch, SUBLANE))
    batch_p = _round_up(batch, tile_b)
    s_p = jnp.pad(s.astype(jnp.float32),
                  ((0, batch_p - batch), (0, meta.sd_p - sd)))

    rows, lane_w = slab.shape
    kernel = functools.partial(
        _critic_fused_kernel,
        sd_p=meta.sd_p, l1=meta.l1, l2=meta.l2, l3=meta.l3,
        r_w1=meta.r_w1, r_b1=meta.r_b1, r_w2=meta.r_w2,
        r_b2=meta.r_b2, r_w3=meta.r_w3, r_b3=meta.r_b3)

    out = pl.pallas_call(
        kernel,
        out_shape=jax.ShapeDtypeStruct((batch_p, meta.l3), jnp.float32),
        grid=(batch_p // tile_b,),
        in_specs=[
            pl.BlockSpec((tile_b, meta.sd_p), lambda i: (i, 0)),   # activation stream
            pl.BlockSpec((rows, lane_w), lambda i: (0, 0)),        # weights: VMEM-resident
        ],
        out_specs=pl.BlockSpec((tile_b, meta.l3), lambda i: (i, 0)),
        compiler_params=pltpu.CompilerParams(
            dimension_semantics=("parallel",)),                    # v7x: shard batch over 2 TCs
    )(s_p, slab)

    q = out[:batch]
    return q[:, :ad], q[:, ad:2 * ad]


# ----------------------------------------------------------------------------
# Parameter construction matching the PyTorch module's init (xavier_uniform
# weights, bias = 0.01).  Weights are stored as [in, out].
# ----------------------------------------------------------------------------
def _xavier_uniform(key, fan_in, fan_out):
    bound = jnp.sqrt(6.0 / (fan_in + fan_out))
    return jax.random.uniform(key, (fan_in, fan_out), jnp.float32, -bound, bound)


def make_qnet_params(key, state_dim, action_dim, n_hidden_units):
    dims = [state_dim, n_hidden_units[0], n_hidden_units[1], action_dim]
    keys = jax.random.split(key, 3)
    params = []
    for i in range(3):
        w = _xavier_uniform(keys[i], dims[i], dims[i + 1])
        b = jnp.full((1, dims[i + 1]), 0.01, jnp.float32)
        params.extend([w, b])
    return tuple(params)


# TODO(synk): save_checkpoint / load_checkpoint (torch.save / torch.load) are
# host-side I/O and have no Pallas equivalent; only forward() is implemented.

if __name__ == "__main__":
    state_dim = 16
    action_dim = 8
    n_hidden_units = (32, 32)
    batch = 4

    root = jax.random.PRNGKey(0)
    k_s, k_q1, k_q2 = jax.random.split(root, 3)

    s = jax.random.normal(k_s, (batch, state_dim), jnp.float32)
    params1 = make_qnet_params(k_q1, state_dim, action_dim, n_hidden_units)
    params2 = make_qnet_params(k_q2, state_dim, action_dim, n_hidden_units)

    # One-time packing (off the hot path).
    slab, meta = pack_critic_params(params1, params2)
    slab = jax.block_until_ready(slab)

    q1, q2 = critic_forward(s, slab, meta=meta)
    jax.block_until_ready((q1, q2))

    # Reference check in plain JAX against the *unfused* parameters.
    def ref_mlp(x, p):
        w1, b1, w2, b2, w3, b3 = p
        h = jnp.maximum(x @ w1 + b1, 0.0)
        h = jnp.maximum(h @ w2 + b2, 0.0)
        return h @ w3 + b3

    r1 = ref_mlp(s, params1)
    r2 = ref_mlp(s, params2)
    assert q1.shape == (batch, action_dim) and q2.shape == (batch, action_dim)
    assert jnp.allclose(q1, r1, atol=1e-4, rtol=1e-4)
    assert jnp.allclose(q2, r2, atol=1e-4, rtol=1e-4)

    print("KERNEL_OK")
</pallas_src>

<mosaic_0001>
module attributes {stable_mosaic.version = 11 : i64} {
  func.func @_critic_fused_kernel(%arg0: i32, %arg1: memref<8x16xf32, #tpu.memory_space<vmem>>, %arg2: memref<296x128xf32, #tpu.memory_space<vmem>>, %arg3: memref<8x128xf32, #tpu.memory_space<vmem>>) attributes {dimension_semantics = [#tpu.dimension_semantics<parallel>], iteration_bounds = array<i64: 1>, scalar_prefetch = 0 : i64, scratch_operands = 0 : i64, tpu.core_type = #tpu.core_type<tc>, window_params = [{transform_indices = @transform_0, window_bounds = array<i64: 8, 16>}, {pipeline_mode = #tpu.pipeline_mode<synchronous>, transform_indices = @transform_1, window_bounds = array<i64: 296, 128>}, {transform_indices = @transform_2, window_bounds = array<i64: 8, 128>}]} {
    %c0 = arith.constant 0 : index
    %c0_0 = arith.constant 0 : index
    %0 = vector.load %arg1[%c0, %c0_0] : memref<8x16xf32, #tpu.memory_space<vmem>>, vector<8x16xf32>
    %c0_1 = arith.constant 0 : index
    %c0_2 = arith.constant 0 : index
    %1 = vector.load %arg2[%c0_1, %c0_2] : memref<296x128xf32, #tpu.memory_space<vmem>>, vector<16x128xf32>
    %c16 = arith.constant 16 : index
    %c0_3 = arith.constant 0 : index
    %2 = vector.load %arg2[%c16, %c0_3] : memref<296x128xf32, #tpu.memory_space<vmem>>, vector<1x128xf32>
    %c24 = arith.constant 24 : index
    %c0_4 = arith.constant 0 : index
    %3 = vector.load %arg2[%c24, %c0_4] : memref<296x128xf32, #tpu.memory_space<vmem>>, vector<128x128xf32>
    %c152 = arith.constant 152 : index
    %c0_5 = arith.constant 0 : index
    %4 = vector.load %arg2[%c152, %c0_5] : memref<296x128xf32, #tpu.memory_space<vmem>>, vector<1x128xf32>
    %c160 = arith.constant 160 : index
    %c0_6 = arith.constant 0 : index
    %5 = vector.load %arg2[%c160, %c0_6] : memref<296x128xf32, #tpu.memory_space<vmem>>, vector<128x128xf32>
    %c288 = arith.constant 288 : index
    %c0_7 = arith.constant 0 : index
    %6 = vector.load %arg2[%c288, %c0_7] : memref<296x128xf32, #tpu.memory_space<vmem>>, vector<1x128xf32>
    %cst = arith.constant dense<0.000000e+00> : vector<8x128xf32>
    %7 = tpu.matmul %0, %1, %cst {dimension_numbers = #tpu.dot_dimension_numbers<[1], [0], [0], [1], [0, 0, 1, 1], [], []>} : vector<8x16xf32>, vector<16x128xf32>, vector<8x128xf32> -> vector<8x128xf32>
    %8 = vector.broadcast %2 : vector<1x128xf32> to vector<8x128xf32>
    %9 = arith.addf %7, %8 : vector<8x128xf32>
    %cst_8 = arith.constant 0.000000e+00 : f32
    %10 = vector.broadcast %cst_8 : f32 to vector<8x128xf32>
    %11 = arith.maximumf %9, %10 : vector<8x128xf32>
    %cst_9 = arith.constant dense<0.000000e+00> : vector<8x128xf32>
    %12 = tpu.matmul %11, %3, %cst_9 {dimension_numbers = #tpu.dot_dimension_numbers<[1], [0], [0], [1], [0, 0, 1, 1], [], []>} : vector<8x128xf32>, vector<128x128xf32>, vector<8x128xf32> -> vector<8x128xf32>
    %13 = vector.broadcast %4 : vector<1x128xf32> to vector<8x128xf32>
    %14 = arith.addf %12, %13 : vector<8x128xf32>
    %cst_10 = arith.constant 0.000000e+00 : f32
    %15 = vector.broadcast %cst_10 : f32 to vector<8x128xf32>
    %16 = arith.maximumf %14, %15 : vector<8x128xf32>
    %cst_11 = arith.constant dense<0.000000e+00> : vector<8x128xf32>
    %17 = tpu.matmul %16, %5, %cst_11 {dimension_numbers = #tpu.dot_dimension_numbers<[1], [0], [0], [1], [0, 0, 1, 1], [], []>} : vector<8x128xf32>, vector<128x128xf32>, vector<8x128xf32> -> vector<8x128xf32>
    %18 = vector.broadcast %6 : vector<1x128xf32> to vector<8x128xf32>
    %19 = arith.addf %17, %18 : vector<8x128xf32>
    %c0_12 = arith.constant 0 : index
    %c0_13 = arith.constant 0 : index
    %20 = vector.load %arg3[%c0_12, %c0_13] : memref<8x128xf32, #tpu.memory_space<vmem>>, vector<8x128xf32>
    tpu.vector_store %arg3[%c0_12, %c0_13], %19 {strides = array<i32>} : memref<8x128xf32, #tpu.memory_space<vmem>>, vector<8x128xf32>,
    return
  }
  func.func @transform_0(%arg0: i32) -> (i32, i32) {
    %c0_i32 = arith.constant 0 : i32
    %c0_i32_0 = arith.constant 0 : i32
    return %arg0, %c0_i32 : i32, i32
  }
  func.func @transform_1(%arg0: i32) -> (i32, i32) {
    %c0_i32 = arith.constant 0 : i32
    %c0_i32_0 = arith.constant 0 : i32
    %c0_i32_1 = arith.constant 0 : i32
    return %c0_i32, %c0_i32_0 : i32, i32
  }
  func.func @transform_2(%arg0: i32) -> (i32, i32) {
    %c0_i32 = arith.constant 0 : i32
    %c0_i32_0 = arith.constant 0 : i32
    return %arg0, %c0_i32 : i32, i32
  }
}

</mosaic_0001>

<llo_original>
// kernel: critic_forward.1
$region0: #{critic_forward.1}
  #allocation0 [shape = 'u32[]', space=smem, size = 0x4, offset = 0x4, fixed_abs, tag = 'smem constant byte address 0x4 - core index']
  #allocation1 [shape = 'u32[144,128]{1,0:T(1,128)}', space=vmem, size = 0x12000, scoped, tag = 'internal scratch']
  %s0 = inlined_call_operand.vmem [shape: f32[8,16], index: 0, kind: input, shape index: {}]
  %s1 = inlined_call_operand.hbm [shape: f32[296,128], index: 1, kind: input, shape index: {}]
  %s2 = inlined_call_operand.vmem [shape: f32[8,128], index: 2, kind: output, shape index: {}]
  %s3 = sld [smem:[#allocation0]]
  $region22: #{critic_forward.1} parent=0
    _
  %s5 = ssub.s32 1, %s3
  %s6 = scalar_select 0, %s5, %s3
  $region1: #{critic_forward.1} parent=0
    #allocation2 [shape = 'u8[151552]{0}', space=vmem, size = 0x25000, scoped, tag = 'input window, operand 1, single buffered']
    #allocation3 [shape = 's32[1]{0}', space=sflag, size = 0x4, scoped, tag = 'scoped memory for critic_forward.1']
    %7 = vsyncpa [#allocation3], 0
    // Predicated region
    $region2: #{critic_forward.1} parent=1 // pred_check
      _
    $region3: #{critic_forward.1} parent=1 // pred_check_branch
      %9 = sbr.rel (0) target = $region5
    $region4: #{critic_forward.1} parent=1 // pred_region
      _
    $region5: #{critic_forward.1} parent=1 // pred_fallthru
      _
    // Predicated region
    $region6: #{critic_forward.1} parent=1 // pred_check
      _
    $region7: #{critic_forward.1} parent=1 // pred_check_branch
      %11 = sbr.rel (0) target = $region9
    $region8: #{critic_forward.1} parent=1 // pred_region
      %s13 = ssub.s32 4736, 4736
      %14 = vsyncadd [#allocation3], %s13
      %s15 = sshll.u32 [#allocation2], 4
      %s16 = int_to_ptr.vmem [resolvable:$true] %s15
      %21 = dma.hbm_to_vmem [thread:$0]  %s1, 4736, %s16, [#allocation3], 128, 128, 8
    $region9: #{critic_forward.1} parent=1 // pred_fallthru
      _
    // Predicated region
    $region10: #{critic_forward.1} parent=1 // pred_check
      _
    $region11: #{critic_forward.1} parent=1 // pred_check_branch
      %23 = sbr.rel (0) target = $region13
    $region12: #{critic_forward.1} parent=1 // pred_region
      %24 = dma.done [#allocation3], 4736
    $region13: #{critic_forward.1} parent=1 // pred_fallthru
      _
    %v25 = vld [vmem:[%s0] sm:$0xff]
    %v26 = vld [vmem:[#allocation2] sm:$0xff]
    %v27 = vld [vmem:[#allocation2 + $0x8] sm:$0xff]
    %v28 = vld [vmem:[#allocation2 + $0x10] sm:$0x1]
    %v29 = vld [vmem:[#allocation2 + $0x18] sm:$0xff]
    %v30 = vld [vmem:[#allocation2 + $0x20] sm:$0xff]
    %v31 = vld [vmem:[#allocation2 + $0x28] sm:$0xff]
    %v32 = vld [vmem:[#allocation2 + $0x30] sm:$0xff]
    %v33 = vld [vmem:[#allocation2 + $0x38] sm:$0xff]
    %v34 = vld [vmem:[#allocation2 + $0x40] sm:$0xff]
    %v35 = vld [vmem:[#allocation2 + $0x48] sm:$0xff]
    %v36 = vld [vmem:[#allocation2 + $0x50] sm:$0xff]
    %v37 = vld [vmem:[#allocation2 + $0x58] sm:$0xff]
    %v38 = vld [vmem:[#allocation2 + $0x60] sm:$0xff]
    %v39 = vld [vmem:[#allocation2 + $0x68] sm:$0xff]
    %v40 = vld [vmem:[#allocation2 + $0x70] sm:$0xff]
    %v41 = vld [vmem:[#allocation2 + $0x78] sm:$0xff]
    %v42 = vld [vmem:[#allocation2 + $0x80] sm:$0xff]
    %v43 = vld [vmem:[#allocation2 + $0x88] sm:$0xff]
    %v44 = vld [vmem:[#allocation2 + $0x90] sm:$0xff]
    %v45 = vld [vmem:[#allocation2 + $0x98] sm:$0x1]
    %v46 = vld [vmem:[#allocation2 + $0xa0] sm:$0xff]
    %v47 = vld [vmem:[#allocation2 + $0xa8] sm:$0xff]
    %v48 = vld [vmem:[#allocation2 + $0xb0] sm:$0xff]
    %v49 = vld [vmem:[#allocation2 + $0xb8] sm:$0xff]
    %v50 = vld [vmem:[#allocation2 + $0xc0] sm:$0xff]
    %v51 = vld [vmem:[#allocation2 + $0xc8] sm:$0xff]
    %v52 = vld [vmem:[#allocation2 + $0xd0] sm:$0xff]
    %v53 = vld [vmem:[#allocation2 + $0xd8] sm:$0xff]
    %v54 = vld [vmem:[#allocation2 + $0xe0] sm:$0xff]
    %v55 = vld [vmem:[#allocation2 + $0xe8] sm:$0xff]
    %v56 = vld [vmem:[#allocation2 + $0xf0] sm:$0xff]
    %v57 = vld [vmem:[#allocation2 + $0xf8] sm:$0xff]
    %v58 = vld [vmem:[#allocation2 + $0x100] sm:$0xff]
    %v59 = vld [vmem:[#allocation2 + $0x108] sm:$0xff]
    %v60 = vld [vmem:[#allocation2 + $0x110] sm:$0xff]
    %v61 = vld [vmem:[#allocation2 + $0x118] sm:$0xff]
    %v62 = vld [vmem:[#allocation2 + $0x120] sm:$0x1]
    %v63 = vlaneseq
    %v64 = vshrl.u32 %v63, 7
    %v65 = vsub.s32 0, %v64
    %v66 = vrot.slane %v28, %v65
    %vm67 = vcmask 130048
    %v69 = vsel %vm67, %v25, 0
    %71 = vmatprep.subr.mxu0 0.0
    %72 = vmatpush1.msra.mxu0 0.0
    %73 = vmatprep.subr.mxu0 0.0
    %74 = vmatpush1.msra.mxu0 0.0
    %75 = vmatprep.subr.mxu0 0.0
    %76 = vmatpush1.msra.mxu0 0.0
    %77 = vmatprep.subr.mxu0 0.0
    %78 = vmatpush1.msra.mxu0 0.0
    %79 = vmatprep.subr.mxu0 0.0
    %80 = vmatpush1.msra.mxu0 0.0
    %81 = vmatprep.subr.mxu0 0.0
    %82 = vmatpush1.msra.mxu0 0.0
    %83 = vmatprep.subr.mxu0 0.0
    %84 = vmatpush1.msra.mxu0 0.0
    %85 = vmatprep.subr.mxu0 0.0
    %86 = vmatpush1.msra.mxu0 0.0
    %87 = vmatprep.subr.mxu0 0.0
    %88 = vmatpush1.msra.mxu0 0.0
    %89 = vmatprep.subr.mxu0 0.0
    %90 = vmatpush1.msra.mxu0 0.0
    %91 = vmatprep.subr.mxu0 0.0
    %92 = vmatpush1.msra.mxu0 0.0
    %93 = vmatprep.subr.mxu0 0.0
    %94 = vmatpush1.msra.mxu0 0.0
    %95 = vmatprep.subr.mxu0 0.0
    %96 = vmatpush1.msra.mxu0 0.0
    %97 = vmatprep.subr.mxu0 0.0
    %98 = vmatpush1.msra.mxu0 0.0
    %99 = vmatprep.subr.mxu0 0.0
    %100 = vmatpush1.msra.mxu0 %v27
    %101 = vmatprep.subr.mxu0 0.0
    %102 = vmatpush1.msra.mxu0 %v26
    %103 = vmatprep.subr.mxu0 0.0
    %104 = vmatpush2.msra.mxu0 0.0
    %105 = vmatprep.subr.mxu0 0.0
    %106 = vmatpush2.msra.mxu0 0.0
    %107 = vmatprep.subr.mxu0 0.0
    %108 = vmatpush2.msra.mxu0 0.0
    %109 = vmatprep.subr.mxu0 0.0
    %110 = vmatpush2.msra.mxu0 0.0
    %111 = vmatprep.subr.mxu0 0.0
    %112 = vmatpush2.msra.mxu0 0.0
    %113 = vmatprep.subr.mxu0 0.0
    %114 = vmatpush2.msra.mxu0 0.0
    %115 = vmatprep.subr.mxu0 0.0
    %116 = vmatpush2.msra.mxu0 0.0
    %117 = vmatprep.subr.mxu0 0.0
    %118 = vmatpush2.msra.mxu0 0.0
    %119 = vmatprep.subr.mxu0 0.0
    %120 = vmatpush2.msra.mxu0 0.0
    %121 = vmatprep.subr.mxu0 0.0
    %122 = vmatpush2.msra.mxu0 0.0
    %123 = vmatprep.subr.mxu0 0.0
    %124 = vmatpush2.msra.mxu0 0.0
    %125 = vmatprep.subr.mxu0 0.0
    %126 = vmatpush2.msra.mxu0 0.0
    %127 = vmatprep.subr.mxu0 0.0
    %128 = vmatpush2.msra.mxu0 0.0
    %129 = vmatprep.subr.mxu0 0.0
    %130 = vmatpush2.msra.mxu0 0.0
    %131 = vmatprep.subr.mxu0 0.0
    %132 = vmatpush2.msra.mxu0 0.0
    %133 = vmatprep.subr.mxu0 0.0
    %134 = vmatpush2.msra.mxu0 0.0
    %135 = vmatprep.mubr.f32.mxu0 0.0
    %136 = vmatmul.mubr.f32.gmra.mxu0 %v69
    %v137 = vpop.f32.mrf.mxu0
    %v138 = vadd.f32 %v66, %v137
    %v139 = vpop.f32.mrf.mxu0
    %140 = vdwg.mxu0
    %v141 = vmax.f32 %v138, 0.0
    %v142 = vlaneseq
    %v143 = vshrl.u32 %v142, 7
    %v144 = vsub.s32 0, %v143
    %v145 = vrot.slane %v45, %v144
    %146 = vmatprep.subr.mxu0 0.0
    %147 = vmatpush1.msra.mxu0 %v44
    %148 = vmatprep.subr.mxu0 0.0
    %149 = vmatpush1.msra.mxu0 %v43
    %150 = vmatprep.subr.mxu0 0.0
    %151 = vmatpush1.msra.mxu0 %v42
    %152 = vmatprep.subr.mxu0 0.0
    %153 = vmatpush1.msra.mxu0 %v41
    %154 = vmatprep.subr.mxu0 0.0
    %155 = vmatpush1.msra.mxu0 %v40
    %156 = vmatprep.subr.mxu0 0.0
    %157 = vmatpush1.msra.mxu0 %v39
    %158 = vmatprep.subr.mxu0 0.0
    %159 = vmatpush1.msra.mxu0 %v38
    %160 = vmatprep.subr.mxu0 0.0
    %161 = vmatpush1.msra.mxu0 %v37
    %162 = vmatprep.subr.mxu0 0.0
    %163 = vmatpush1.msra.mxu0 %v36
    %164 = vmatprep.subr.mxu0 0.0
    %165 = vmatpush1.msra.mxu0 %v35
    %166 = vmatprep.subr.mxu0 0.0
    %167 = vmatpush1.msra.mxu0 %v34
    %168 = vmatprep.subr.mxu0 0.0
    %169 = vmatpush1.msra.mxu0 %v33
    %170 = vmatprep.subr.mxu0 0.0
    %171 = vmatpush1.msra.mxu0 %v32
    %172 = vmatprep.subr.mxu0 0.0
    %173 = vmatpush1.msra.mxu0 %v31
    %174 = vmatprep.subr.mxu0 0.0
    %175 = vmatpush1.msra.mxu0 %v30
    %176 = vmatprep.subr.mxu0 0.0
    %177 = vmatpush1.msra.mxu0 %v29
    %178 = vmatprep.subr.mxu0 0.0
    %179 = vmatpush2.msra.mxu0 0.0
    %180 = vmatprep.subr.mxu0 0.0
    %181 = vmatpush2.msra.mxu0 0.0
    %182 = vmatprep.subr.mxu0 0.0
    %183 = vmatpush2.msra.mxu0 0.0
    %184 = vmatprep.subr.mxu0 0.0
    %185 = vmatpush2.msra.mxu0 0.0
    %186 = vmatprep.subr.mxu0 0.0
    %187 = vmatpush2.msra.mxu0 0.0
    %188 = vmatprep.subr.mxu0 0.0
    %189 = vmatpush2.msra.mxu0 0.0
    %190 = vmatprep.subr.mxu0 0.0
    %191 = vmatpush2.msra.mxu0 0.0
    %192 = vmatprep.subr.mxu0 0.0
    %193 = vmatpush2.msra.mxu0 0.0
    %194 = vmatprep.subr.mxu0 0.0
    %195 = vmatpush2.msra.mxu0 0.0
    %196 = vmatprep.subr.mxu0 0.0
    %197 = vmatpush2.msra.mxu0 0.0
    %198 = vmatprep.subr.mxu0 0.0
    %199 = vmatpush2.msra.mxu0 0.0
    %200 = vmatprep.subr.mxu0 0.0
    %201 = vmatpush2.msra.mxu0 0.0
    %202 = vmatprep.subr.mxu0 0.0
    %203 = vmatpush2.msra.mxu0 0.0
    %204 = vmatprep.subr.mxu0 0.0
    %205 = vmatpush2.msra.mxu0 0.0
    %206 = vmatprep.subr.mxu0 0.0
    %207 = vmatpush2.msra.mxu0 0.0
    %208 = vmatprep.subr.mxu0 0.0
    %209 = vmatpush2.msra.mxu0 0.0
    %210 = vmatprep.mubr.f32.mxu0 0.0
    %211 = vmatmul.mubr.f32.gmra.mxu0 %v141
    %v212 = vpop.f32.mrf.mxu0
    %v213 = vadd.f32 %v145, %v212
    %v214 = vpop.f32.mrf.mxu0
    %215 = vdwg.mxu0
    %v216 = vmax.f32 %v213, 0.0
    %v217 = vlaneseq
    %v218 = vshrl.u32 %v217, 7
    %v219 = vsub.s32 0, %v218
    %v220 = vrot.slane %v62, %v219
    %221 = vmatprep.subr.mxu0 0.0
    %222 = vmatpush1.msra.mxu0 %v61
    %223 = vmatprep.subr.mxu0 0.0
    %224 = vmatpush1.msra.mxu0 %v60
    %225 = vmatprep.subr.mxu0 0.0
    %226 = vmatpush1.msra.mxu0 %v59
    %227 = vmatprep.subr.mxu0 0.0
    %228 = vmatpush1.msra.mxu0 %v58
    %229 = vmatprep.subr.mxu0 0.0
    %230 = vmatpush1.msra.mxu0 %v57
    %231 = vmatprep.subr.mxu0 0.0
    %232 = vmatpush1.msra.mxu0 %v56
    %233 = vmatprep.subr.mxu0 0.0
    %234 = vmatpush1.msra.mxu0 %v55
    %235 = vmatprep.subr.mxu0 0.0
    %236 = vmatpush1.msra.mxu0 %v54
    %237 = vmatprep.subr.mxu0 0.0
    %238 = vmatpush1.msra.mxu0 %v53
    %239 = vmatprep.subr.mxu0 0.0
    %240 = vmatpush1.msra.mxu0 %v52
    %241 = vmatprep.subr.mxu0 0.0
    %242 = vmatpush1.msra.mxu0 %v51
    %243 = vmatprep.subr.mxu0 0.0
    %244 = vmatpush1.msra.mxu0 %v50
    %245 = vmatprep.subr.mxu0 0.0
    %246 = vmatpush1.msra.mxu0 %v49
    %247 = vmatprep.subr.mxu0 0.0
    %248 = vmatpush1.msra.mxu0 %v48
    %249 = vmatprep.subr.mxu0 0.0
    %250 = vmatpush1.msra.mxu0 %v47
    %251 = vmatprep.subr.mxu0 0.0
    %252 = vmatpush1.msra.mxu0 %v46
    %253 = vmatprep.subr.mxu0 0.0
    %254 = vmatpush2.msra.mxu0 0.0
    %255 = vmatprep.subr.mxu0 0.0
    %256 = vmatpush2.msra.mxu0 0.0
    %257 = vmatprep.subr.mxu0 0.0
    %258 = vmatpush2.msra.mxu0 0.0
    %259 = vmatprep.subr.mxu0 0.0
    %260 = vmatpush2.msra.mxu0 0.0
    %261 = vmatprep.subr.mxu0 0.0
    %262 = vmatpush2.msra.mxu0 0.0
    %263 = vmatprep.subr.mxu0 0.0
    %264 = vmatpush2.msra.mxu0 0.0
    %265 = vmatprep.subr.mxu0 0.0
    %266 = vmatpush2.msra.mxu0 0.0
    %267 = vmatprep.subr.mxu0 0.0
    %268 = vmatpush2.msra.mxu0 0.0
    %269 = vmatprep.subr.mxu0 0.0
    %270 = vmatpush2.msra.mxu0 0.0
    %271 = vmatprep.subr.mxu0 0.0
    %272 = vmatpush2.msra.mxu0 0.0
    %273 = vmatprep.subr.mxu0 0.0
    %274 = vmatpush2.msra.mxu0 0.0
    %275 = vmatprep.subr.mxu0 0.0
    %276 = vmatpush2.msra.mxu0 0.0
    %277 = vmatprep.subr.mxu0 0.0
    %278 = vmatpush2.msra.mxu0 0.0
    %279 = vmatprep.subr.mxu0 0.0
    %280 = vmatpush2.msra.mxu0 0.0
    %281 = vmatprep.subr.mxu0 0.0
    %282 = vmatpush2.msra.mxu0 0.0
    %283 = vmatprep.subr.mxu0 0.0
    %284 = vmatpush2.msra.mxu0 0.0
    %285 = vmatprep.mubr.f32.mxu0 0.0
    %286 = vmatmul.mubr.f32.gmra.mxu0 %v216
    %v287 = vpop.f32.mrf.mxu0
    %v288 = vadd.f32 %v220, %v287
    %v289 = vpop.f32.mrf.mxu0
    %290 = vdwg.mxu0
    %291 = vst [vmem:[%s2] sm:$0xff] %v288
    // Predicated region
    $region14: #{critic_forward.1} parent=1 // pred_check
      _
    $region15: #{critic_forward.1} parent=1 // pred_check_branch
      %293 = sbr.rel (0) target = $region17
    $region16: #{critic_forward.1} parent=1 // pred_region
      _
    $region17: #{critic_forward.1} parent=1 // pred_fallthru
      _
    // Predicated region
    $region18: #{critic_forward.1} parent=1 // pred_check
      _
    $region19: #{critic_forward.1} parent=1 // pred_check_branch
      %295 = sbr.rel (0) target = $region21
    $region20: #{critic_forward.1} parent=1 // pred_region
      _
    $region21: #{critic_forward.1} parent=1 // pred_fallthru
      _
    %296 = vsyncpa [#allocation3], 1

</llo_original>
